<compile_context>
chip_gen: v5e
topology: v5e:2x2
jax: 0.10.0
libtpu: 0.0.40
codegen_flags: <defaults>
</compile_context>

<pallas_src>
import jax
import jax.numpy as jnp
from jax.experimental import pallas as pl
from jax.experimental.pallas import tpu as pltpu

_SUBLANE = 8


def _round_up(n: int, m: int) -> int:
    return ((n + m - 1) // m) * m


def _make_hloss_kernel(inv_temp: float, batch: int, tile_b: int, n_classes: int,
                       need_mask: bool, use_mxu_reduce: bool):
    # inv_temp / batch / tile_b / n_classes are Python scalars -> lowered as
    # immediates, never captured traced constants.

    def hloss_kernel(x_ref, part_ref):
        x = x_ref[...].astype(jnp.float32) * inv_temp            # [TB, C] f32

        if need_mask:
            # Last block over-reads the batch edge: mask garbage rows BEFORE
            # exp so Inf/NaN can never be produced (robust form).
            i = pl.program_id(0)
            rows = jax.lax.broadcasted_iota(jnp.int32, (tile_b, 1), 0)
            valid = (i * tile_b + rows) < batch                   # [TB, 1]
            x = jnp.where(valid, x, 0.0)

        # --- stable softmax stats over the class (lane) axis ---
        m = jnp.max(x, axis=-1, keepdims=True)                    # [TB, 1]
        xm = x - m
        e = jnp.exp(xm)                                           # only per-element EUP op

        if use_mxu_reduce:
            # Offload the two lane reductions to the (otherwise idle) MXU.
            ones = jnp.ones((n_classes, 1), dtype=jnp.float32)
            s = jnp.dot(e, ones, preferred_element_type=jnp.float32)        # [TB, 1]
            d = jnp.dot(e * xm, ones, preferred_element_type=jnp.float32)   # [TB, 1]
        else:
            s = jnp.sum(e, axis=-1, keepdims=True)                # [TB, 1]
            d = jnp.sum(e * xm, axis=-1, keepdims=True)           # [TB, 1]

        # -sum_c p*log(p) per row = log(s) - d/s (per-row log / reciprocal only).
        row_ent = jnp.log(s) - d * pl.reciprocal(s, approx=True)  # [TB, 1]

        if need_mask:
            row_ent = jnp.where(valid, row_ent, 0.0)

        # One per-tile partial sum in its own SMEM block (no RMW chain), so all
        # grid steps stay independent ("parallel" -> megacore split on v7x).
        part_ref[0, 0] = jnp.sum(row_ent)

    return hloss_kernel


def _default_block_bytes() -> int:
    # v7x (64 MiB VMEM, ~3.2 TB/s per TC): bigger blocks amortize the ~0.35 us
    # per-grid-step cost.  v5e/v6e: ~4 MiB is enough.
    try:
        info = pltpu.get_tpu_info()
        if getattr(info, "vmem_capacity_bytes", 128 << 20) <= (64 << 20):
            return 6 << 20
    except Exception:
        pass
    return 4 << 20


def hloss(x: jax.Array, temp_factor: float = 1.0, tile_b: int | None = None,
          target_block_bytes: int | None = None,
          use_mxu_reduce: bool = False) -> jax.Array:
    """Entropy loss. x: [B, C] logits (f32 or bf16). Returns a scalar float32."""
    B, C = x.shape
    itemsize = jnp.dtype(x.dtype).itemsize
    if target_block_bytes is None:
        target_block_bytes = _default_block_bytes()

    # VMEM footprint per batch row of a block: double-buffered input block plus
    # ~4 f32 temporaries (x, xm, e, e*xm) materialized inside the kernel.
    bytes_per_row_vmem = C * (2 * itemsize + 4 * 4)
    vmem_budget = 40 << 20                      # keep well under v7x's 64 MiB

    b_pad8 = _round_up(B, _SUBLANE)
    if tile_b is None:
        tb = target_block_bytes // max(1, C * itemsize)
    else:
        tb = int(tile_b)
    tb = min(tb, max(1, vmem_budget // max(1, bytes_per_row_vmem)))
    tb = max(_SUBLANE, (tb // _SUBLANE) * _SUBLANE)
    tb = min(tb, b_pad8)

    num_tiles = -(-B // tb)
    # No jnp.pad: the last block over-reads the edge and is masked in-kernel.
    need_mask = (num_tiles * tb) != B

    est_vmem = 2 * tb * C * itemsize + 4 * tb * C * 4
    vmem_limit = int(min(max(est_vmem * 3 // 2, 32 << 20), 56 << 20))

    kernel = _make_hloss_kernel(float(1.0 / float(temp_factor)), B, tb, C,
                                need_mask, use_mxu_reduce)

    partials = pl.pallas_call(
        kernel,
        out_shape=jax.ShapeDtypeStruct((num_tiles, 1), jnp.float32),
        grid_spec=pltpu.PrefetchScalarGridSpec(
            num_scalar_prefetch=0,
            grid=(num_tiles,),
            in_specs=[
                # Full class dim per tile (softmax needs the whole row);
                # lane padding for non-128-multiple C is accepted (HBM-bound).
                pl.BlockSpec((tb, C), lambda i: (i, 0)),
            ],
            out_specs=pl.BlockSpec((1, 1), lambda i: (i, 0),
                                   memory_space=pltpu.SMEM),
        ),
        compiler_params=pltpu.CompilerParams(
            dimension_semantics=("parallel",),
            vmem_limit_bytes=vmem_limit,
        ),
    )(x)

    # Final reduction + mean over ALL elements in the wrapper (cheap, f32).
    return jnp.sum(partials) * (1.0 / float(B * C))


def hloss_ref(x: jax.Array, temp_factor: float = 1.0) -> jax.Array:
    sm = jax.nn.softmax(x.astype(jnp.float32) / temp_factor, axis=1)
    ent = -sm * jnp.log(sm + 1e-6)
    return jnp.mean(ent)


if __name__ == "__main__":
    key = jax.random.PRNGKey(0)
    k1, k2, k3, k4 = jax.random.split(key, 4)

    # Test 1: small f32 logits, exact tile fit.
    x1 = jax.random.normal(k1, (16, 128), dtype=jnp.float32)
    out1 = jax.block_until_ready(hloss(x1, temp_factor=1.0))
    ref1 = jax.block_until_ready(hloss_ref(x1, temp_factor=1.0))
    assert jnp.allclose(out1, ref1, rtol=1e-5, atol=2e-5), (out1, ref1)

    # Test 2: bf16 logits (cast to f32 in-kernel), ragged batch (edge mask, no pad).
    x2 = jax.random.normal(k2, (50, 96), dtype=jnp.float32).astype(jnp.bfloat16)
    out2 = jax.block_until_ready(hloss(x2, temp_factor=2.0))
    ref2 = jax.block_until_ready(hloss_ref(x2.astype(jnp.float32), temp_factor=2.0))
    assert jnp.allclose(out2, ref2, rtol=1e-5, atol=2e-5), (out2, ref2)

    # Test 3: multi-tile grid with a tail tile (forced small tile_b).
    x3 = jax.random.normal(k3, (40, 128), dtype=jnp.float32)
    out3 = jax.block_until_ready(hloss(x3, temp_factor=1.0, tile_b=16))
    ref3 = jax.block_until_ready(hloss_ref(x3, temp_factor=1.0))
    assert jnp.allclose(out3, ref3, rtol=1e-5, atol=2e-5), (out3, ref3)

    # Test 4: MXU-offloaded lane reductions (v7x knob), exact tile fit.
    x4 = jax.random.normal(k4, (32, 128), dtype=jnp.float32)
    out4 = jax.block_until_ready(hloss(x4, temp_factor=1.0, use_mxu_reduce=True))
    ref4 = jax.block_until_ready(hloss_ref(x4, temp_factor=1.0))
    assert jnp.allclose(out4, ref4, rtol=1e-5, atol=2e-5), (out4, ref4)

    print("KERNEL_OK")
</pallas_src>

<mosaic_0001>
module attributes {stable_mosaic.version = 11 : i64} {
  func.func @hloss_kernel(%arg0: i32, %arg1: memref<16x128xf32, #tpu.memory_space<vmem>>, %arg2: memref<1x1xf32, #tpu.memory_space<smem>>) attributes {dimension_semantics = [#tpu.dimension_semantics<parallel>], iteration_bounds = array<i64: 1>, scalar_prefetch = 0 : i64, scratch_operands = 0 : i64, tpu.core_type = #tpu.core_type<tc>, window_params = [{transform_indices = @transform_0, window_bounds = array<i64: 16, 128>}, {transform_indices = @transform_1, window_bounds = array<i64: 1, 1>}]} {
    %c0 = arith.constant 0 : index
    %c0_0 = arith.constant 0 : index
    %0 = vector.load %arg1[%c0, %c0_0] : memref<16x128xf32, #tpu.memory_space<vmem>>, vector<16x128xf32>
    %cst = arith.constant 1.000000e+00 : f32
    %1 = vector.broadcast %cst : f32 to vector<16x128xf32>
    %2 = arith.mulf %0, %1 : vector<16x128xf32>
    %cst_1 = arith.constant dense<0xFF800000> : vector<16xf32>
    %3 = vector.multi_reduction <maximumf>, %2, %cst_1 [1] : vector<16x128xf32> to vector<16xf32>
    %4 = vector.shape_cast %3 : vector<16xf32> to vector<16x1xf32>
    %5 = vector.broadcast %4 : vector<16x1xf32> to vector<16x128xf32>
    %6 = arith.subf %2, %5 : vector<16x128xf32>
    %7 = math.exp %6 : vector<16x128xf32>
    %cst_2 = arith.constant dense<0.000000e+00> : vector<16xf32>
    %8 = vector.multi_reduction <add>, %7, %cst_2 [1] : vector<16x128xf32> to vector<16xf32>
    %9 = vector.shape_cast %8 : vector<16xf32> to vector<16x1xf32>
    %10 = arith.mulf %7, %6 : vector<16x128xf32>
    %cst_3 = arith.constant dense<0.000000e+00> : vector<16xf32>
    %11 = vector.multi_reduction <add>, %10, %cst_3 [1] : vector<16x128xf32> to vector<16xf32>
    %12 = vector.shape_cast %11 : vector<16xf32> to vector<16x1xf32>
    %13 = math.log %9 : vector<16x1xf32>
    %14 = tpu.reciprocal %9 {approx = true} : vector<16x1xf32> -> vector<16x1xf32>
    %15 = arith.mulf %12, %14 : vector<16x1xf32>
    %16 = arith.subf %13, %15 : vector<16x1xf32>
    %17 = vector.shape_cast %16 : vector<16x1xf32> to vector<1x16x1xf32>
    %cst_4 = arith.constant dense<0.000000e+00> : vector<1xf32>
    %18 = vector.multi_reduction <add>, %17, %cst_4 [1, 2] : vector<1x16x1xf32> to vector<1xf32>
    %19 = vector.shape_cast %18 : vector<1xf32> to vector<1x1x1xf32>
    %20 = vector.extract %19[0, 0, 0] : f32 from vector<1x1x1xf32>
    %c0_5 = arith.constant 0 : index
    %c0_6 = arith.constant 0 : index
    %21 = memref.load %arg2[%c0_5, %c0_6] : memref<1x1xf32, #tpu.memory_space<smem>>
    memref.store %20, %arg2[%c0_5, %c0_6] : memref<1x1xf32, #tpu.memory_space<smem>>
    return
  }
  func.func @transform_0(%arg0: i32) -> (i32, i32) {
    %c0_i32 = arith.constant 0 : i32
    %c0_i32_0 = arith.constant 0 : i32
    return %arg0, %c0_i32 : i32, i32
  }
  func.func @transform_1(%arg0: i32) -> (i32, i32) {
    %c0_i32 = arith.constant 0 : i32
    %c0_i32_0 = arith.constant 0 : i32
    return %arg0, %c0_i32 : i32, i32
  }
}

</mosaic_0001>

<llo_original>
// kernel: tpu_custom_call.1
$region0: #{tpu_custom_call.1}
  #allocation0 [shape = 'u32[]', space=smem, size = 0x4, offset = 0x4, fixed_abs, tag = 'smem constant byte address 0x4 - core index']
  #allocation1 [shape = 'u32[72,128]{1,0:T(1,128)}', space=vmem, size = 0x9000, scoped, tag = 'internal scratch']
  %s0 = inlined_call_operand.hbm [shape: f32[16,128], index: 0, kind: input, shape index: {}]
  %s1 = inlined_call_operand.hbm [shape: f32[1,1], index: 1, kind: output, shape index: {}]
  %s2 = sld [smem:[#allocation0]]
  $region18: #{tpu_custom_call.1} parent=0
    _
  %s4 = ssub.s32 1, %s2
  %s5 = scalar_select 0, %s4, %s2
  $region1: #{tpu_custom_call.1} parent=0
    #allocation2 [shape = 'u8[8192]{0}', space=vmem, size = 0x2000, scoped, tag = 'input window, operand 0, single buffered']
    #allocation3 [shape = 's32[1]{0}', space=sflag, size = 0x4, scoped, tag = 'scoped memory for tpu_custom_call.1']
    #allocation4 [shape = 's32[1]{0}', space=sflag, size = 0x4, scoped, tag = 'scoped memory for tpu_custom_call.1']
    #allocation5 [shape = 'u8[512]{0}', space=smem, size = 0x200, scoped, tag = 'output window, operand 0, single buffered']
    %6 = vsyncpa [#allocation3], 0
    %7 = vsyncpa [#allocation4], 0
    // Predicated region
    $region2: #{tpu_custom_call.1} parent=1 // pred_check
      _
    $region3: #{tpu_custom_call.1} parent=1 // pred_check_branch
      %9 = sbr.rel (0) target = $region5
    $region4: #{tpu_custom_call.1} parent=1 // pred_region
      %11 = vsyncadd [#allocation3], 0
      %s12 = sshll.u32 %s0, 4
      %s13 = int_to_ptr.hbm [resolvable:$true] %s12
      %s14 = sshll.u32 [#allocation2], 4
      %s15 = int_to_ptr.vmem [resolvable:$true] %s14
      %20 = dma.hbm_to_vmem [thread:$0]  %s13, 256, %s15, [#allocation3], 128, 128, 8
    $region5: #{tpu_custom_call.1} parent=1 // pred_fallthru
      _
    // Predicated region
    $region6: #{tpu_custom_call.1} parent=1 // pred_check
      _
    $region7: #{tpu_custom_call.1} parent=1 // pred_check_branch
      %22 = sbr.rel (0) target = $region9
    $region8: #{tpu_custom_call.1} parent=1 // pred_region
      %24 = dma.done [#allocation3], 256
    $region9: #{tpu_custom_call.1} parent=1 // pred_fallthru
      _
    %v25 = vld [vmem:[#allocation2] sm:$0xff]
    %v26 = vld [vmem:[#allocation2 + $0x8] sm:$0xff]
    %27 = vmax.xlane.f32.xlu0 %v25
    %v28 = vpop.xlane.xlu0 %27
    %29 = vmax.xlane.f32.xlu0 %v26
    %v30 = vpop.xlane.xlu0 %29
    %v31 = vsub.f32 %v25, %v28
    %v32 = vsub.f32 %v26, %v30
    %v33 = vmul.f32 %v31, 1.442695
    %v34 = vpow.pop %v33
    %v35 = vmul.f32 %v32, 1.442695
    %v36 = vpow.pop %v35
    %37 = vadd.xlane.f32.xlu0 %v34
    %v38 = vpop.xlane.xlu0 %37
    %39 = vadd.xlane.f32.xlu0 %v36
    %v40 = vpop.xlane.xlu0 %39
    %v41 = vmul.f32 %v34, %v31
    %v42 = vmul.f32 %v36, %v32
    %43 = vadd.xlane.f32.xlu0 %v41
    %v44 = vpop.xlane.xlu0 %43
    %45 = vadd.xlane.f32.xlu0 %v42
    %v46 = vpop.xlane.xlu0 %45
    %v47 = vlog2.pop %v38
    %v48 = vmul.f32 %v47, 0.6931472
    %v49 = vlog2.pop %v40
    %v50 = vmul.f32 %v49, 0.6931472
    %v51 = vrcp.pop %v38
    %v52 = vrcp.pop %v40
    %v53 = vmul.f32 %v44, %v51
    %v54 = vmul.f32 %v46, %v52
    %v55 = vsub.f32 %v48, %v53
    %v56 = vsub.f32 %v50, %v54
    %vm57 = vcmask 7168
    %v58 = vsel %vm57, %v55, 0.0
    %v59 = vsel %vm57, %v56, 0.0
    %v60 = vadd.f32 %v58, %v59
    %61 = vadd.xlane.f32.xlu0 %v60
    %v62 = vpop.xlane.xlu0 %61
    %v63 = vrot.slane %v62, 4
    %v64 = vadd.f32 %v62, %v63
    %v65 = vrot.slane %v64, 2
    %v66 = vadd.f32 %v64, %v65
    %v67 = vrot.slane %v66, 1
    %v68 = vadd.f32 %v66, %v67
    %s69 = vtos %v68
    %s70 = scalar_lea.smem [#allocation5], 0
    %71 = sst [smem:[%s70]] %s69
    // Predicated region
    $region10: #{tpu_custom_call.1} parent=1 // pred_check
      _
    $region11: #{tpu_custom_call.1} parent=1 // pred_check_branch
      %73 = sbr.rel (0) target = $region13
    $region12: #{tpu_custom_call.1} parent=1 // pred_region
      %75 = vsyncadd [#allocation4], 0
      %s77 = sshll.u32 %s1, 4
      %s78 = int_to_ptr.hbm [resolvable:$true] %s77
      %80 = dma.smem_to_hbm [#allocation5], 16, %s78, [#allocation4]
    $region13: #{tpu_custom_call.1} parent=1 // pred_fallthru
      _
    // Predicated region
    $region14: #{tpu_custom_call.1} parent=1 // pred_check
      _
    $region15: #{tpu_custom_call.1} parent=1 // pred_check_branch
      %82 = sbr.rel (0) target = $region17
    $region16: #{tpu_custom_call.1} parent=1 // pred_region
      %84 = dma.done [#allocation4], 16
    $region17: #{tpu_custom_call.1} parent=1 // pred_fallthru
      _
    %85 = sfence
    %86 = vsyncpa [#allocation3], 1
    %87 = vsyncpa [#allocation4], 1

</llo_original>
